<compile_context>
chip_gen: v7x
topology: tpu7x:2x2x1
jax: 0.10.0
libtpu: 0.0.40
codegen_flags: <defaults>
</compile_context>

<pallas_src>
import math

import jax
import jax.numpy as jnp
from jax.experimental import pallas as pl
from jax.experimental.pallas import tpu as pltpu

_SUBLANE = 8
_LANE = 128


def _add_pe_kernel(x_ref, pe_ref, o_ref):
    # x_ref : (TS, TB, D) activation tile
    # pe_ref: (TS, D)     positional-encoding tile (2-D: no sublane-padded size-1 batch dim)
    o_ref[...] = (x_ref[...] + pe_ref[...][:, None, :]).astype(o_ref.dtype)


def make_positional_encoding(d_model, max_len=5000, dtype=jnp.float32):
    """pe buffer, identical to the PyTorch __init__: shape (max_len, 1, d_model)."""
    assert d_model % 2 == 0, "d_model must be even (same assumption as the PyTorch module)"
    position = jnp.arange(max_len, dtype=jnp.float32)[:, None]           # (max_len, 1)
    div_term = jnp.exp(jnp.arange(0, d_model, 2, dtype=jnp.float32)
                       * (-math.log(10000.0) / d_model))                 # (d_model//2,)
    angles = position * div_term                                         # (max_len, d_model//2)
    pe = jnp.zeros((max_len, d_model), jnp.float32)
    pe = pe.at[:, 0::2].set(jnp.sin(angles))
    pe = pe.at[:, 1::2].set(jnp.cos(angles))
    return pe[:, None, :].astype(dtype)                                  # (max_len, 1, d_model)


def _round_up(n, m):
    return ((n + m - 1) // m) * m


def _choose_tiles(S, B, D, itemsize,
                  vmem_budget_bytes=4 * 1024 * 1024,   # per buffer set, before 2x double buffering
                  target_steps=8,                      # >=4-8 grid steps: pipelining + v7x dual TC
                  min_block_bytes=512 * 1024):         # don't shrink blocks below ~512 KiB
    d_pad = _round_up(D, _LANE)

    # Prefer the full batch: (ts, B, D) x/out blocks are contiguous HBM slabs.
    tb = B
    if ((2 * _round_up(B, _SUBLANE) + 1) * d_pad * itemsize * _SUBLANE > vmem_budget_bytes
            and B > _SUBLANE):
        # Even an 8-seq-row full-batch tile blows the budget (huge B*D): tile batch too.
        tb = (vmem_budget_bytes // (_SUBLANE * 2 * d_pad * itemsize)) // _SUBLANE * _SUBLANE
        tb = min(max(_SUBLANE, tb), B)
    tb_pad = _round_up(tb, _SUBLANE)

    # Per seq row: x + out blocks (activation dtype) + the 2-D pe block.
    row_bytes = (2 * tb_pad + 1) * d_pad * itemsize

    # Largest seq tile that fits the budget.  Multiple of 8: the (ts, D) pe block
    # puts ts on the sublane axis, so it must be 8-divisible unless it spans all of pe.
    ts = max(_SUBLANE, (vmem_budget_bytes // row_bytes) // _SUBLANE * _SUBLANE)

    # Cap ts so the grid has several steps (software pipelining; v7x has 2 TensorCores),
    # but keep each block >= min_block_bytes so per-step overhead (~0.35 us) stays noise.
    ts_target = _round_up(max(1, -(-S // target_steps)), _SUBLANE)
    ts_floor = _round_up(max(1, -(-min_block_bytes // row_bytes)), _SUBLANE)
    ts = min(ts, max(ts_target, ts_floor))
    return max(_SUBLANE, ts), tb


def positional_encoding_forward(x, pe, *, block_seq=None, block_batch=None):
    """x: (S, B, D); pe: (max_len, 1, D) or (max_len, D).  Returns x + pe[:S]."""
    S, B, D = x.shape
    pe2 = pe.reshape(pe.shape[0], pe.shape[-1]) if pe.ndim == 3 else pe
    assert pe2.shape[0] >= S and pe2.shape[1] == D
    # Carry pe in the activation dtype: halves its HBM/VMEM footprint for bf16
    # activations and keeps the add native-width on v6e/v7x.
    pe2 = pe2.astype(x.dtype)

    # Small-shape fast path: below ~256 KiB the fused XLA add is already at roofline
    # and pallas_call launch/step overhead would dominate.
    itemsize = jnp.dtype(x.dtype).itemsize
    if S * B * D * itemsize <= 256 * 1024:
        return (x + pe2[:S][:, None, :]).astype(x.dtype)

    ts_auto, tb_auto = _choose_tiles(S, B, D, itemsize)
    ts = min(block_seq or ts_auto, S)
    tb = min(block_batch or tb_auto, B)
    if tb < B:
        assert tb % _SUBLANE == 0, "batch tile must be a multiple of 8 unless it covers all of B"
    if ts < S:
        assert ts % _SUBLANE == 0, "seq tile must be a multiple of 8 unless it covers all of S"
    elif S % _SUBLANE != 0:
        # pe's (ts, D) block needs ts % 8 == 0 unless ts equals pe's full seq extent;
        # make it so (tiny slice, only hit for small ragged S).
        pe2 = pe2[:S]

    # Batch is the innermost grid axis, so the pe block (which depends only on the
    # seq-tile index) stays resident in VMEM across the batch sweep (usually a 1-size axis).
    grid = (pl.cdiv(S, ts), pl.cdiv(B, tb))

    return pl.pallas_call(
        _add_pe_kernel,
        out_shape=jax.ShapeDtypeStruct((S, B, D), x.dtype),
        grid=grid,
        in_specs=[
            pl.BlockSpec((ts, tb, D), lambda i, j: (i, j, 0)),
            pl.BlockSpec((ts, D), lambda i, j: (i, 0)),   # full pe buffer, no wrapper-side slice
        ],
        out_specs=pl.BlockSpec((ts, tb, D), lambda i, j: (i, j, 0)),
        compiler_params=pltpu.CompilerParams(
            dimension_semantics=("parallel", "parallel")),
    )(x, pe2)


if __name__ == "__main__":
    d_model = 128   # lane-dense (multiple of 128)
    max_len = 512
    seq_len = 256
    batch = 8       # sublane-dense (multiple of 8)

    key = jax.random.PRNGKey(0)
    kx, kx2, kx3 = jax.random.split(key, 3)
    pe = make_positional_encoding(d_model, max_len=max_len)

    # 1) Main path: auto-tiled kernel (grid = (4, 1), full-batch contiguous blocks).
    x = jax.random.normal(kx, (seq_len, batch, d_model), dtype=jnp.float32)
    ref = x + pe[:seq_len]
    out_auto = jax.block_until_ready(positional_encoding_forward(x, pe))
    assert out_auto.shape == (seq_len, batch, d_model)
    assert jnp.allclose(out_auto, ref, atol=1e-6, rtol=1e-6)

    # 2) Explicit tiles (exercises the manual-override path).
    out_tiled = jax.block_until_ready(
        positional_encoding_forward(x, pe, block_seq=64, block_batch=8))
    assert jnp.allclose(out_tiled, ref, atol=1e-6, rtol=1e-6)

    # 3) Ragged seq length (partial final seq block, pe read stays in max_len bounds).
    s_ragged = 250
    x_r = jax.random.normal(kx2, (s_ragged, batch, d_model), dtype=jnp.float32)
    out_r = jax.block_until_ready(positional_encoding_forward(x_r, pe))
    assert jnp.allclose(out_r, x_r + pe[:s_ragged], atol=1e-6, rtol=1e-6)

    # 4) bf16 activations: pe is cast to bf16 inside the wrapper (half the pe bytes).
    x_bf16 = jax.random.normal(kx3, (seq_len, batch, d_model), dtype=jnp.bfloat16)
    out_bf16 = jax.block_until_ready(positional_encoding_forward(x_bf16, pe))
    ref_bf16 = (x_bf16.astype(jnp.float32) + pe[:seq_len]).astype(jnp.bfloat16)
    assert jnp.allclose(out_bf16.astype(jnp.float32), ref_bf16.astype(jnp.float32),
                        atol=5e-2, rtol=5e-2)

    # 5) Tiny shape: fused-XLA fast path (no kernel launch).
    x_small = jax.random.normal(kx, (8, 2, d_model), dtype=jnp.float32)
    out_small = jax.block_until_ready(positional_encoding_forward(x_small, pe))
    assert jnp.allclose(out_small, x_small + pe[:8], atol=1e-6, rtol=1e-6)

    print("KERNEL_OK")
</pallas_src>

<mosaic_0001>
module attributes {stable_mosaic.version = 11 : i64} {
  func.func @_add_pe_kernel(%arg0: i32, %arg1: i32, %arg2: memref<64x8x128xf32, #tpu.memory_space<vmem>>, %arg3: memref<64x128xf32, #tpu.memory_space<vmem>>, %arg4: memref<64x8x128xf32, #tpu.memory_space<vmem>>) attributes {dimension_semantics = [#tpu.dimension_semantics<parallel>, #tpu.dimension_semantics<parallel>], iteration_bounds = array<i64: 4, 1>, scalar_prefetch = 0 : i64, scratch_operands = 0 : i64, tpu.core_type = #tpu.core_type<tc>, window_params = [{transform_indices = @transform_0, window_bounds = array<i64: 64, 8, 128>}, {transform_indices = @transform_1, window_bounds = array<i64: 64, 128>}, {transform_indices = @transform_2, window_bounds = array<i64: 64, 8, 128>}]} {
    %c0 = arith.constant 0 : index
    %c0_0 = arith.constant 0 : index
    %c0_1 = arith.constant 0 : index
    %0 = vector.load %arg2[%c0, %c0_0, %c0_1] : memref<64x8x128xf32, #tpu.memory_space<vmem>>, vector<64x8x128xf32>
    %c0_2 = arith.constant 0 : index
    %c0_3 = arith.constant 0 : index
    %1 = vector.load %arg3[%c0_2, %c0_3] : memref<64x128xf32, #tpu.memory_space<vmem>>, vector<64x128xf32>
    %2 = vector.shape_cast %1 : vector<64x128xf32> to vector<64x1x128xf32>
    %3 = vector.broadcast %2 : vector<64x1x128xf32> to vector<64x8x128xf32>
    %4 = arith.addf %0, %3 : vector<64x8x128xf32>
    %c0_4 = arith.constant 0 : index
    %c0_5 = arith.constant 0 : index
    %c0_6 = arith.constant 0 : index
    %5 = vector.load %arg4[%c0_4, %c0_5, %c0_6] : memref<64x8x128xf32, #tpu.memory_space<vmem>>, vector<64x8x128xf32>
    tpu.vector_store %arg4[%c0_4, %c0_5, %c0_6], %4 {strides = array<i32>} : memref<64x8x128xf32, #tpu.memory_space<vmem>>, vector<64x8x128xf32>,
    return
  }
  func.func @transform_0(%arg0: i32, %arg1: i32) -> (i32, i32, i32) {
    %c0_i32 = arith.constant 0 : i32
    %c0_i32_0 = arith.constant 0 : i32
    return %arg0, %arg1, %c0_i32 : i32, i32, i32
  }
  func.func @transform_1(%arg0: i32, %arg1: i32) -> (i32, i32) {
    %c0_i32 = arith.constant 0 : i32
    %c0_i32_0 = arith.constant 0 : i32
    return %arg0, %c0_i32 : i32, i32
  }
  func.func @transform_2(%arg0: i32, %arg1: i32) -> (i32, i32, i32) {
    %c0_i32 = arith.constant 0 : i32
    %c0_i32_0 = arith.constant 0 : i32
    return %arg0, %arg1, %c0_i32 : i32, i32, i32
  }
}

</mosaic_0001>

<llo_original>
// kernel: tpu_custom_call.1
$region0: #{tpu_custom_call.1}
  #allocation0 [shape = 'u32[]', space=smem, size = 0x4, offset = 0x4, fixed_abs, tag = 'smem constant byte address 0x4 - core index']
  #allocation1 [shape = 'u32[144,128]{1,0:T(1,128)}', space=vmem, size = 0x12000, scoped, tag = 'internal scratch']
  %s0 = inlined_call_operand.hbm [shape: f32[256,8,128], index: 0, kind: input, shape index: {}]
  %s1 = inlined_call_operand.hbm [shape: f32[512,128], index: 1, kind: input, shape index: {}]
  %s2 = inlined_call_operand.hbm [shape: f32[256,8,128], index: 2, kind: output, shape index: {}]
  %s3 = sld [smem:[#allocation0]]
  $region49: #{tpu_custom_call.1} parent=0
    _
  %s5 = ssub.s32 1, %s3
  %s6 = scalar_select 0, %s5, %s3
  $region1: #{tpu_custom_call.1} parent=0
    #allocation2 [shape = 'u8[524288]{0}', space=vmem, size = 0x80000, scoped, tag = 'input window, operand 0']
    #allocation3 [shape = 's32[2]{0}', space=sflag, size = 0x8, scoped, tag = 'scoped memory for tpu_custom_call.1']
    #allocation4 [shape = 's32[2]{0}', space=sflag, size = 0x8, scoped, tag = 'scoped memory for tpu_custom_call.1']
    #allocation5 [shape = 'u8[65536]{0}', space=vmem, size = 0x10000, scoped, tag = 'input window, operand 1']
    #allocation6 [shape = 's32[2]{0}', space=sflag, size = 0x8, scoped, tag = 'scoped memory for tpu_custom_call.1']
    #allocation7 [shape = 'u8[524288]{0}', space=vmem, size = 0x80000, scoped, tag = 'output window, operand 0']
    %7 = vsyncpa [#allocation3], 0
    %s8 = scalar_lea.sflag [#allocation3], 1
    %9 = vsyncpa %s8, 0
    %10 = vsyncpa [#allocation6], 0
    %s11 = scalar_lea.sflag [#allocation6], 1
    %12 = vsyncpa %s11, 0
    %13 = vsyncpa [#allocation4], 0
    %s14 = scalar_lea.sflag [#allocation4], 1
    %15 = vsyncpa %s14, 0
    loop: start=0, step=1, limit=6
    $region2: #{tpu_custom_call.1} parent=1 // loop_pre_header
      _
    $region3: #{tpu_custom_call.1} parent=1 // loop_header
      %s17 = sphi 0, %s21
      %p18 = scmp.ge.s32.totalorder %s17, 6
      %s24 = sphi 0, %s36
      %s25 = sphi 0, %s32
      %s26 = sphi 0, %s24
      %s27 = sphi 0, %s25
      %s28 = sphi 0, %s26
      %s29 = sphi 0, %s27
      %s41 = sphi 0, %s43
      %s44 = sphi 0, %s41
      %s45 = sphi 0, %s44
      %s61 = sphi 0, %s45
      %s67 = sphi 0, %s69
      %s70 = sphi 0, %s67
      %s71 = sphi 0, %s70
      %s87 = sphi 0, %s71
      %s95 = sphi 0, %s97
      %s98 = sphi 0, %s95
      %s99 = sphi 0, %s98
      %s115 = sphi 0, %s99
    $region4: #{tpu_custom_call.1} parent=1 // loop_header_branch
      %20 = sbr.rel (%p18) target = $region8
    $region5: #{tpu_custom_call.1} parent=1 // loop_body
      %s22 = ssub.s32 %s17, 1
      %s23 = ssub.s32 %s17, 2
      %s30 = sadd.s32 1, %s25
      %p31 = scmp.ge.s32.totalorder %s30, 1
      %s32 = scalar_select %p31, 0, %s30
      %s33 = sadd.s32 1, %s24
      %s34 = scalar_select %p31, %s33, %s24
      %p35 = scmp.ge.s32.totalorder %s34, 4
      %s36 = scalar_select %p35, 0, %s34
      %s37 = ssub.s32 %s24, %s36
      %s38 = ssub.s32 %s25, %s32
      %s39 = sor.u32 %s37, %s38
      %p40 = scmp.eq.s32.totalorder %s39, 0
      %s42 = sadd.s32 %s41, 1
      %s43 = scalar_select %p40, %s41, %s42
      %p46 = pneg %p40
      %p47 = scmp.eq.s32.totalorder %s17, 3
      %p48 = por %p46, %p47
      %p49 = scmp.ne.s32.totalorder %s41, %s44
      %p50 = scmp.eq.s32.totalorder %s17, 0
      %p51 = por %p49, %p50
      %p52 = scmp.ne.s32.totalorder %s41, %s44
      %p53 = scmp.eq.s32.totalorder %s22, 3
      %p54 = por %p52, %p53
      %p55 = scmp.ne.s32.totalorder %s44, %s45
      %p56 = scmp.eq.s32.totalorder %s22, 0
      %p57 = por %p55, %p56
      %p58 = scmp.ne.s32.totalorder %s44, %s45
      %p59 = scmp.eq.s32.totalorder %s23, 3
      %p60 = por %p58, %p59
      %p62 = scmp.ne.s32.totalorder %s45, %s61
      %p63 = scmp.eq.s32.totalorder %s23, 0
      %p64 = por %p62, %p63
      %s65 = ssub.s32 %s24, %s36
      %p66 = scmp.eq.s32.totalorder %s65, 0
      %s68 = sadd.s32 %s67, 1
      %s69 = scalar_select %p66, %s67, %s68
      %p72 = pneg %p66
      %p73 = scmp.eq.s32.totalorder %s17, 3
      %p74 = por %p72, %p73
      %p75 = scmp.ne.s32.totalorder %s67, %s70
      %p76 = scmp.eq.s32.totalorder %s17, 0
      %p77 = por %p75, %p76
      %p78 = scmp.ne.s32.totalorder %s67, %s70
      %p79 = scmp.eq.s32.totalorder %s22, 3
      %p80 = por %p78, %p79
      %p81 = scmp.ne.s32.totalorder %s70, %s71
      %p82 = scmp.eq.s32.totalorder %s22, 0
      %p83 = por %p81, %p82
      %p84 = scmp.ne.s32.totalorder %s70, %s71
      %p85 = scmp.eq.s32.totalorder %s23, 3
      %p86 = por %p84, %p85
      %p88 = scmp.ne.s32.totalorder %s71, %s87
      %p89 = scmp.eq.s32.totalorder %s23, 0
      %p90 = por %p88, %p89
      %s91 = ssub.s32 %s24, %s36
      %s92 = ssub.s32 %s25, %s32
      %s93 = sor.u32 %s91, %s92
      %p94 = scmp.eq.s32.totalorder %s93, 0
      %s96 = sadd.s32 %s95, 1
      %s97 = scalar_select %p94, %s95, %s96
      %p100 = pneg %p94
      %p101 = scmp.eq.s32.totalorder %s17, 3
      %p102 = por %p100, %p101
      %p103 = scmp.ne.s32.totalorder %s95, %s98
      %p104 = scmp.eq.s32.totalorder %s17, 0
      %p105 = por %p103, %p104
      %p106 = scmp.ne.s32.totalorder %s95, %s98
      %p107 = scmp.eq.s32.totalorder %s22, 3
      %p108 = por %p106, %p107
      %p109 = scmp.ne.s32.totalorder %s98, %s99
      %p110 = scmp.eq.s32.totalorder %s22, 0
      %p111 = por %p109, %p110
      %p112 = scmp.ne.s32.totalorder %s98, %s99
      %p113 = scmp.eq.s32.totalorder %s23, 3
      %p114 = por %p112, %p113
      %p116 = scmp.ne.s32.totalorder %s99, %s115
      %p117 = scmp.eq.s32.totalorder %s23, 0
      %p118 = por %p116, %p117
      %p119 = scmp.le.s32.totalorder 1, %s17
      %p120 = scmp.lt.s32.totalorder %s17, 5
      %p121 = pnand %p119, %p120
      %p122 = pneg %p121
      // Predicated region
      $region9: #{tpu_custom_call.1} parent=5 // pred_check
        _
      $region10: #{tpu_custom_call.1} parent=5 // pred_check_branch
        %124 = sbr.rel (%p121) target = $region12
      $region11: #{tpu_custom_call.1} parent=5 // pred_region
        %s125 = ssub.s32 %s17, 1
      $region12: #{tpu_custom_call.1} parent=5 // pred_fallthru
        _
      %p126 = scmp.lt.s32.totalorder %s17, 4
      // Predicated region
      $region13: #{tpu_custom_call.1} parent=5 // pred_check
        %p127 = pneg %p126
      $region14: #{tpu_custom_call.1} parent=5 // pred_check_branch
        %129 = sbr.rel (%p127) target = $region16
      $region15: #{tpu_custom_call.1} parent=5 // pred_region
        // Predicated region
        $region17: #{tpu_custom_call.1} parent=15 // pred_check
          %p130 = pneg %p51
        $region18: #{tpu_custom_call.1} parent=15 // pred_check_branch
          %132 = sbr.rel (%p130) target = $region20
        $region19: #{tpu_custom_call.1} parent=15 // pred_region
          %s133 = sand.u32 %s41, 1
          %s134 = scalar_lea.sflag [#allocation3], %s133
          %s135 = sand.u32 %s41, 1
          %s136 = smul.addr %s135, 512
          %s137 = scalar_lea.vmem [#allocation2], %s136
          %s138 = smul.u32 64, %s24
          %s140 = ssub.s32 8192, 8192
          %141 = vsyncadd %s134, %s140
          %s142 = sadd.s32 %s25, %s138
          %s143 = smul.addr %s142, 128
          %s144 = scalar_lea.hbm %s0, %s143
          %s145 = sshll.u32 %s137, 4
          %s146 = int_to_ptr.vmem [resolvable:$true] %s145
          %151 = dma.hbm_to_vmem [thread:$0]  %s144, 8192, %s146, %s134, 128, 128, 8
        $region20: #{tpu_custom_call.1} parent=15 // pred_fallthru
          _
        // Predicated region
        $region21: #{tpu_custom_call.1} parent=15 // pred_check
          %p152 = pneg %p77
        $region22: #{tpu_custom_call.1} parent=15 // pred_check_branch
          %154 = sbr.rel (%p152) target = $region24
        $region23: #{tpu_custom_call.1} parent=15 // pred_region
          %s155 = sand.u32 %s67, 1
          %s156 = scalar_lea.sflag [#allocation6], %s155
          %s157 = sand.u32 %s67, 1
          %s158 = smul.addr %s157, 64
          %s159 = scalar_lea.vmem [#allocation5], %s158
          %s160 = smul.u32 8, %s24
          %s162 = ssub.s32 1024, 1024
          %163 = vsyncadd %s156, %s162
          %s164 = smul.addr %s160, 128
          %s165 = scalar_lea.hbm %s1, %s164
          %s166 = sshll.u32 %s159, 4
          %s167 = int_to_ptr.vmem [resolvable:$true] %s166
          %172 = dma.hbm_to_vmem [thread:$0]  %s165, 1024, %s167, %s156, 128, 128, 8
        $region24: #{tpu_custom_call.1} parent=15 // pred_fallthru
          _
      $region16: #{tpu_custom_call.1} parent=5 // pred_fallthru
        _
      %p173 = scmp.le.s32.totalorder 1, %s17
      %p174 = scmp.lt.s32.totalorder %s17, 5
      %p175 = pnand %p173, %p174
      %p176 = pneg %p175
      // Predicated region
      $region25: #{tpu_custom_call.1} parent=5 // pred_check
        _
      $region26: #{tpu_custom_call.1} parent=5 // pred_check_branch
        %178 = sbr.rel (%p175) target = $region28
      $region27: #{tpu_custom_call.1} parent=5 // pred_region
        %s179 = ssub.s32 %s17, 1
        %s180 = sand.u32 %s44, 1
        %s181 = scalar_lea.sflag [#allocation3], %s180
        %s182 = sand.u32 %s44, 1
        %s183 = smul.addr %s182, 512
        %s184 = scalar_lea.vmem [#allocation2], %s183
        // Predicated region
        $region29: #{tpu_custom_call.1} parent=27 // pred_check
          %p185 = pneg %p57
        $region30: #{tpu_custom_call.1} parent=27 // pred_check_branch
          %187 = sbr.rel (%p185) target = $region32
        $region31: #{tpu_custom_call.1} parent=27 // pred_region
          %188 = dma.done %s181, 8192
        $region32: #{tpu_custom_call.1} parent=27 // pred_fallthru
          _
        %s189 = sand.u32 %s70, 1
        %s190 = scalar_lea.sflag [#allocation6], %s189
        %s191 = sand.u32 %s70, 1
        %s192 = smul.addr %s191, 64
        %s193 = scalar_lea.vmem [#allocation5], %s192
        // Predicated region
        $region33: #{tpu_custom_call.1} parent=27 // pred_check
          %p194 = pneg %p83
        $region34: #{tpu_custom_call.1} parent=27 // pred_check_branch
          %196 = sbr.rel (%p194) target = $region36
        $region35: #{tpu_custom_call.1} parent=27 // pred_region
          %197 = dma.done %s190, 1024
        $region36: #{tpu_custom_call.1} parent=27 // pred_fallthru
          _
        %s198 = sand.u32 %s44, 1
        %s199 = scalar_lea.sflag [#allocation3], %s198
        %s200 = sand.u32 %s44, 1
        %s201 = smul.addr %s200, 512
        %s202 = scalar_lea.vmem [#allocation2], %s201
        %p203 = pneg %p57
        %p204 = pneg %p54
        %s205 = sand.u32 %s70, 1
        %s206 = scalar_lea.sflag [#allocation6], %s205
        %s207 = sand.u32 %s70, 1
        %s208 = smul.addr %s207, 64
        %s209 = scalar_lea.vmem [#allocation5], %s208
        %p210 = pneg %p83
        %p211 = pneg %p80
        %p212 = pneg %p111
        %p213 = pneg %p108
        %s214 = sand.u32 %s98, 1
        %s215 = scalar_lea.sflag [#allocation4], %s214
        %s216 = sand.u32 %s98, 1
        %s217 = smul.addr %s216, 512
        %s218 = scalar_lea.vmem [#allocation7], %s217
        %s219 = smul.u32 64, %s26
        %s220 = smul.u32 8, %s26
        %s221 = smul.u32 64, %s26
        %v222 = vld [vmem:[%s184] sm:$0xff]
        %v223 = vld [vmem:[%s184 + $0x8] sm:$0xff]
        %v224 = vld [vmem:[%s184 + $0x10] sm:$0xff]
        %v225 = vld [vmem:[%s184 + $0x18] sm:$0xff]
        %v226 = vld [vmem:[%s184 + $0x20] sm:$0xff]
        %v227 = vld [vmem:[%s184 + $0x28] sm:$0xff]
        %v228 = vld [vmem:[%s184 + $0x30] sm:$0xff]
        %v229 = vld [vmem:[%s184 + $0x38] sm:$0xff]
        %v230 = vld [vmem:[%s184 + $0x40] sm:$0xff]
        %v231 = vld [vmem:[%s184 + $0x48] sm:$0xff]
        %v232 = vld [vmem:[%s184 + $0x50] sm:$0xff]
        %v233 = vld [vmem:[%s184 + $0x58] sm:$0xff]
        %v234 = vld [vmem:[%s184 + $0x60] sm:$0xff]
        %v235 = vld [vmem:[%s184 + $0x68] sm:$0xff]
        %v236 = vld [vmem:[%s184 + $0x70] sm:$0xff]
        %v237 = vld [vmem:[%s184 + $0x78] sm:$0xff]
        %v238 = vld [vmem:[%s184 + $0x80] sm:$0xff]
        %v239 = vld [vmem:[%s184 + $0x88] sm:$0xff]
        %v240 = vld [vmem:[%s184 + $0x90] sm:$0xff]
        %v241 = vld [vmem:[%s184 + $0x98] sm:$0xff]
        %v242 = vld [vmem:[%s184 + $0xa0] sm:$0xff]
        %v243 = vld [vmem:[%s184 + $0xa8] sm:$0xff]
        %v244 = vld [vmem:[%s184 + $0xb0] sm:$0xff]
        %v245 = vld [vmem:[%s184 + $0xb8] sm:$0xff]
        %v246 = vld [vmem:[%s184 + $0xc0] sm:$0xff]
        %v247 = vld [vmem:[%s184 + $0xc8] sm:$0xff]
        %v248 = vld [vmem:[%s184 + $0xd0] sm:$0xff]
        %v249 = vld [vmem:[%s184 + $0xd8] sm:$0xff]
        %v250 = vld [vmem:[%s184 + $0xe0] sm:$0xff]
        %v251 = vld [vmem:[%s184 + $0xe8] sm:$0xff]
        %v252 = vld [vmem:[%s184 + $0xf0] sm:$0xff]
        %v253 = vld [vmem:[%s184 + $0xf8] sm:$0xff]
        %v254 = vld [vmem:[%s184 + $0x100] sm:$0xff]
        %v255 = vld [vmem:[%s184 + $0x108] sm:$0xff]
        %v256 = vld [vmem:[%s184 + $0x110] sm:$0xff]
        %v257 = vld [vmem:[%s184 + $0x118] sm:$0xff]
        %v258 = vld [vmem:[%s184 + $0x120] sm:$0xff]
        %v259 = vld [vmem:[%s184 + $0x128] sm:$0xff]
        %v260 = vld [vmem:[%s184 + $0x130] sm:$0xff]
        %v261 = vld [vmem:[%s184 + $0x138] sm:$0xff]
        %v262 = vld [vmem:[%s184 + $0x140] sm:$0xff]
        %v263 = vld [vmem:[%s184 + $0x148] sm:$0xff]
        %v264 = vld [vmem:[%s184 + $0x150] sm:$0xff]
        %v265 = vld [vmem:[%s184 + $0x158] sm:$0xff]
        %v266 = vld [vmem:[%s184 + $0x160] sm:$0xff]
        %v267 = vld [vmem:[%s184 + $0x168] sm:$0xff]
        %v268 = vld [vmem:[%s184 + $0x170] sm:$0xff]
        %v269 = vld [vmem:[%s184 + $0x178] sm:$0xff]
        %v270 = vld [vmem:[%s184 + $0x180] sm:$0xff]
        %v271 = vld [vmem:[%s184 + $0x188] sm:$0xff]
        %v272 = vld [vmem:[%s184 + $0x190] sm:$0xff]
        %v273 = vld [vmem:[%s184 + $0x198] sm:$0xff]
        %v274 = vld [vmem:[%s184 + $0x1a0] sm:$0xff]
        %v275 = vld [vmem:[%s184 + $0x1a8] sm:$0xff]
        %v276 = vld [vmem:[%s184 + $0x1b0] sm:$0xff]
        %v277 = vld [vmem:[%s184 + $0x1b8] sm:$0xff]
        %v278 = vld [vmem:[%s184 + $0x1c0] sm:$0xff]
        %v279 = vld [vmem:[%s184 + $0x1c8] sm:$0xff]
        %v280 = vld [vmem:[%s184 + $0x1d0] sm:$0xff]
        %v281 = vld [vmem:[%s184 + $0x1d8] sm:$0xff]
        %v282 = vld [vmem:[%s184 + $0x1e0] sm:$0xff]
        %v283 = vld [vmem:[%s184 + $0x1e8] sm:$0xff]
        %v284 = vld [vmem:[%s184 + $0x1f0] sm:$0xff]
        %v285 = vld [vmem:[%s184 + $0x1f8] sm:$0xff]
        %v286 = vld [vmem:[%s193] sm:$0xff]
        %v287 = vld [vmem:[%s193 + $0x8] sm:$0xff]
        %v288 = vld [vmem:[%s193 + $0x10] sm:$0xff]
        %v289 = vld [vmem:[%s193 + $0x18] sm:$0xff]
        %v290 = vld [vmem:[%s193 + $0x20] sm:$0xff]
        %v291 = vld [vmem:[%s193 + $0x28] sm:$0xff]
        %v292 = vld [vmem:[%s193 + $0x30] sm:$0xff]
        %v293 = vld [vmem:[%s193 + $0x38] sm:$0xff]
        %v302 = vcombine.high %v286, %v286
        %v304 = vunpack.c.l.s4 1966171168
        %v305 = vunpack.c.0.s8 %v304
        %v306 = vlaneseq
        %v307 = vshrl.u32 %v306, 7
        %v308 = vsub.s32 %v305, %v307
        %v309 = vrot.slane %v286, %v308
        %v311 = vunpack.c.l.s4 1966171168
        %v312 = vunpack.c.0.s8 %v311
        %v313 = vlaneseq
        %v314 = vshrl.u32 %v313, 7
        %v315 = vsub.s32 %v312, %v314
        %v316 = vrot.slane %v302, %v315
        %v317 = vcombine.high %v309, %v309
        %v318 = vcombine.high %v316, %v316
        %v320 = vunpack.c.l.s4 1966171168
        %v321 = vunpack.c.0.s8 %v320
        %v322 = vlaneseq
        %v323 = vshrl.u32 %v322, 7
        %v324 = vsub.s32 %v321, %v323
        %v325 = vrot.slane %v309, %v324
        %v327 = vunpack.c.l.s4 1966171168
        %v328 = vunpack.c.0.s8 %v327
        %v329 = vlaneseq
        %v330 = vshrl.u32 %v329, 7
        %v331 = vsub.s32 %v328, %v330
        %v332 = vrot.slane %v316, %v331
        %v334 = vunpack.c.l.s4 1966171168
        %v335 = vunpack.c.0.s8 %v334
        %v336 = vlaneseq
        %v337 = vshrl.u32 %v336, 7
        %v338 = vsub.s32 %v335, %v337
        %v339 = vrot.slane %v317, %v338
        %v341 = vunpack.c.l.s4 1966171168
        %v342 = vunpack.c.0.s8 %v341
        %v343 = vlaneseq
        %v344 = vshrl.u32 %v343, 7
        %v345 = vsub.s32 %v342, %v344
        %v346 = vrot.slane %v318, %v345
        %v347 = vcombine.high %v325, %v325
        %v348 = vcombine.high %v332, %v332
        %v349 = vcombine.high %v339, %v339
        %v350 = vcombine.high %v346, %v346
        %v351 = vcombine.high %v287, %v287
        %v353 = vunpack.c.l.s4 1966171168
        %v354 = vunpack.c.0.s8 %v353
        %v355 = vlaneseq
        %v356 = vshrl.u32 %v355, 7
        %v357 = vsub.s32 %v354, %v356
        %v358 = vrot.slane %v287, %v357
        %v360 = vunpack.c.l.s4 1966171168
        %v361 = vunpack.c.0.s8 %v360
        %v362 = vlaneseq
        %v363 = vshrl.u32 %v362, 7
        %v364 = vsub.s32 %v361, %v363
        %v365 = vrot.slane %v351, %v364
        %v366 = vcombine.high %v358, %v358
        %v367 = vcombine.high %v365, %v365
        %v369 = vunpack.c.l.s4 1966171168
        %v370 = vunpack.c.0.s8 %v369
        %v371 = vlaneseq
        %v372 = vshrl.u32 %v371, 7
        %v373 = vsub.s32 %v370, %v372
        %v374 = vrot.slane %v358, %v373
        %v376 = vunpack.c.l.s4 1966171168
        %v377 = vunpack.c.0.s8 %v376
        %v378 = vlaneseq
        %v379 = vshrl.u32 %v378, 7
        %v380 = vsub.s32 %v377, %v379
        %v381 = vrot.slane %v365, %v380
        %v383 = vunpack.c.l.s4 1966171168
        %v384 = vunpack.c.0.s8 %v383
        %v385 = vlaneseq
        %v386 = vshrl.u32 %v385, 7
        %v387 = vsub.s32 %v384, %v386
        %v388 = vrot.slane %v366, %v387
        %v390 = vunpack.c.l.s4 1966171168
        %v391 = vunpack.c.0.s8 %v390
        %v392 = vlaneseq
        %v393 = vshrl.u32 %v392, 7
        %v394 = vsub.s32 %v391, %v393
        %v395 = vrot.slane %v367, %v394
        %v396 = vcombine.high %v374, %v374
        %v397 = vcombine.high %v381, %v381
        %v398 = vcombine.high %v388, %v388
        %v399 = vcombine.high %v395, %v395
        %v400 = vcombine.high %v288, %v288
        %v402 = vunpack.c.l.s4 1966171168
        %v403 = vunpack.c.0.s8 %v402
        %v404 = vlaneseq
        %v405 = vshrl.u32 %v404, 7
        %v406 = vsub.s32 %v403, %v405
        %v407 = vrot.slane %v288, %v406
        %v409 = vunpack.c.l.s4 1966171168
        %v410 = vunpack.c.0.s8 %v409
        %v411 = vlaneseq
        %v412 = vshrl.u32 %v411, 7
        %v413 = vsub.s32 %v410, %v412
        %v414 = vrot.slane %v400, %v413
        %v415 = vcombine.high %v407, %v407
        %v416 = vcombine.high %v414, %v414
        %v418 = vunpack.c.l.s4 1966171168
        %v419 = vunpack.c.0.s8 %v418
        %v420 = vlaneseq
        %v421 = vshrl.u32 %v420, 7
        %v422 = vsub.s32 %v419, %v421
        %v423 = vrot.slane %v407, %v422
        %v425 = vunpack.c.l.s4 1966171168
        %v426 = vunpack.c.0.s8 %v425
        %v427 = vlaneseq
        %v428 = vshrl.u32 %v427, 7
        %v429 = vsub.s32 %v426, %v428
        %v430 = vrot.slane %v414, %v429
        %v432 = vunpack.c.l.s4 1966171168
        %v433 = vunpack.c.0.s8 %v432
        %v434 = vlaneseq
        %v435 = vshrl.u32 %v434, 7
        %v436 = vsub.s32 %v433, %v435
        %v437 = vrot.slane %v415, %v436
        %v439 = vunpack.c.l.s4 1966171168
        %v440 = vunpack.c.0.s8 %v439
        %v441 = vlaneseq
        %v442 = vshrl.u32 %v441, 7
        %v443 = vsub.s32 %v440, %v442
        %v444 = vrot.slane %v416, %v443
        %v445 = vcombine.high %v423, %v423
        %v446 = vcombine.high %v430, %v430
        %v447 = vcombine.high %v437, %v437
        %v448 = vcombine.high %v444, %v444
        %v449 = vcombine.high %v289, %v289
        %v451 = vunpack.c.l.s4 1966171168
        %v452 = vunpack.c.0.s8 %v451
        %v453 = vlaneseq
        %v454 = vshrl.u32 %v453, 7
        %v455 = vsub.s32 %v452, %v454
        %v456 = vrot.slane %v289, %v455
        %v458 = vunpack.c.l.s4 1966171168
        %v459 = vunpack.c.0.s8 %v458
        %v460 = vlaneseq
        %v461 = vshrl.u32 %v460, 7
        %v462 = vsub.s32 %v459, %v461
        %v463 = vrot.slane %v449, %v462
        %v464 = vcombine.high %v456, %v456
        %v465 = vcombine.high %v463, %v463
        %v467 = vunpack.c.l.s4 1966171168
        %v468 = vunpack.c.0.s8 %v467
        %v469 = vlaneseq
        %v470 = vshrl.u32 %v469, 7
        %v471 = vsub.s32 %v468, %v470
        %v472 = vrot.slane %v456, %v471
        %v474 = vunpack.c.l.s4 1966171168
        %v475 = vunpack.c.0.s8 %v474
        %v476 = vlaneseq
        %v477 = vshrl.u32 %v476, 7
        %v478 = vsub.s32 %v475, %v477
        %v479 = vrot.slane %v463, %v478
        %v481 = vunpack.c.l.s4 1966171168
        %v482 = vunpack.c.0.s8 %v481
        %v483 = vlaneseq
        %v484 = vshrl.u32 %v483, 7
        %v485 = vsub.s32 %v482, %v484
        %v486 = vrot.slane %v464, %v485
        %v488 = vunpack.c.l.s4 1966171168
        %v489 = vunpack.c.0.s8 %v488
        %v490 = vlaneseq
        %v491 = vshrl.u32 %v490, 7
        %v492 = vsub.s32 %v489, %v491
        %v493 = vrot.slane %v465, %v492
        %v494 = vcombine.high %v472, %v472
        %v495 = vcombine.high %v479, %v479
        %v496 = vcombine.high %v486, %v486
        %v497 = vcombine.high %v493, %v493
        %v498 = vcombine.high %v290, %v290
        %v500 = vunpack.c.l.s4 1966171168
        %v501 = vunpack.c.0.s8 %v500
        %v502 = vlaneseq
        %v503 = vshrl.u32 %v502, 7
        %v504 = vsub.s32 %v501, %v503
        %v505 = vrot.slane %v290, %v504
        %v507 = vunpack.c.l.s4 1966171168
        %v508 = vunpack.c.0.s8 %v507
        %v509 = vlaneseq
        %v510 = vshrl.u32 %v509, 7
        %v511 = vsub.s32 %v508, %v510
        %v512 = vrot.slane %v498, %v511
        %v513 = vcombine.high %v505, %v505
        %v514 = vcombine.high %v512, %v512
        %v516 = vunpack.c.l.s4 1966171168
        %v517 = vunpack.c.0.s8 %v516
        %v518 = vlaneseq
        %v519 = vshrl.u32 %v518, 7
        %v520 = vsub.s32 %v517, %v519
        %v521 = vrot.slane %v505, %v520
        %v523 = vunpack.c.l.s4 1966171168
        %v524 = vunpack.c.0.s8 %v523
        %v525 = vlaneseq
        %v526 = vshrl.u32 %v525, 7
        %v527 = vsub.s32 %v524, %v526
        %v528 = vrot.slane %v512, %v527
        %v530 = vunpack.c.l.s4 1966171168
        %v531 = vunpack.c.0.s8 %v530
        %v532 = vlaneseq
        %v533 = vshrl.u32 %v532, 7
        %v534 = vsub.s32 %v531, %v533
        %v535 = vrot.slane %v513, %v534
        %v537 = vunpack.c.l.s4 1966171168
        %v538 = vunpack.c.0.s8 %v537
        %v539 = vlaneseq
        %v540 = vshrl.u32 %v539, 7
        %v541 = vsub.s32 %v538, %v540
        %v542 = vrot.slane %v514, %v541
        %v543 = vcombine.high %v521, %v521
        %v544 = vcombine.high %v528, %v528
        %v545 = vcombine.high %v535, %v535
        %v546 = vcombine.high %v542, %v542
        %v547 = vcombine.high %v291, %v291
        %v549 = vunpack.c.l.s4 1966171168
        %v550 = vunpack.c.0.s8 %v549
        %v551 = vlaneseq
        %v552 = vshrl.u32 %v551, 7
        %v553 = vsub.s32 %v550, %v552
        %v554 = vrot.slane %v291, %v553
        %v556 = vunpack.c.l.s4 1966171168
        %v557 = vunpack.c.0.s8 %v556
        %v558 = vlaneseq
        %v559 = vshrl.u32 %v558, 7
        %v560 = vsub.s32 %v557, %v559
        %v561 = vrot.slane %v547, %v560
        %v562 = vcombine.high %v554, %v554
        %v563 = vcombine.high %v561, %v561
        %v565 = vunpack.c.l.s4 1966171168
        %v566 = vunpack.c.0.s8 %v565
        %v567 = vlaneseq
        %v568 = vshrl.u32 %v567, 7
        %v569 = vsub.s32 %v566, %v568
        %v570 = vrot.slane %v554, %v569
        %v572 = vunpack.c.l.s4 1966171168
        %v573 = vunpack.c.0.s8 %v572
        %v574 = vlaneseq
        %v575 = vshrl.u32 %v574, 7
        %v576 = vsub.s32 %v573, %v575
        %v577 = vrot.slane %v561, %v576
        %v579 = vunpack.c.l.s4 1966171168
        %v580 = vunpack.c.0.s8 %v579
        %v581 = vlaneseq
        %v582 = vshrl.u32 %v581, 7
        %v583 = vsub.s32 %v580, %v582
        %v584 = vrot.slane %v562, %v583
        %v586 = vunpack.c.l.s4 1966171168
        %v587 = vunpack.c.0.s8 %v586
        %v588 = vlaneseq
        %v589 = vshrl.u32 %v588, 7
        %v590 = vsub.s32 %v587, %v589
        %v591 = vrot.slane %v563, %v590
        %v592 = vcombine.high %v570, %v570
        %v593 = vcombine.high %v577, %v577
        %v594 = vcombine.high %v584, %v584
        %v595 = vcombine.high %v591, %v591
        %v596 = vcombine.high %v292, %v292
        %v598 = vunpack.c.l.s4 1966171168
        %v599 = vunpack.c.0.s8 %v598
        %v600 = vlaneseq
        %v601 = vshrl.u32 %v600, 7
        %v602 = vsub.s32 %v599, %v601
        %v603 = vrot.slane %v292, %v602
        %v605 = vunpack.c.l.s4 1966171168
        %v606 = vunpack.c.0.s8 %v605
        %v607 = vlaneseq
        %v608 = vshrl.u32 %v607, 7
        %v609 = vsub.s32 %v606, %v608
        %v610 = vrot.slane %v596, %v609
        %v611 = vcombine.high %v603, %v603
        %v612 = vcombine.high %v610, %v610
        %v614 = vunpack.c.l.s4 1966171168
        %v615 = vunpack.c.0.s8 %v614
        %v616 = vlaneseq
        %v617 = vshrl.u32 %v616, 7
        %v618 = vsub.s32 %v615, %v617
        %v619 = vrot.slane %v603, %v618
        %v621 = vunpack.c.l.s4 1966171168
        %v622 = vunpack.c.0.s8 %v621
        %v623 = vlaneseq
        %v624 = vshrl.u32 %v623, 7
        %v625 = vsub.s32 %v622, %v624
        %v626 = vrot.slane %v610, %v625
        %v628 = vunpack.c.l.s4 1966171168
        %v629 = vunpack.c.0.s8 %v628
        %v630 = vlaneseq
        %v631 = vshrl.u32 %v630, 7
        %v632 = vsub.s32 %v629, %v631
        %v633 = vrot.slane %v611, %v632
        %v635 = vunpack.c.l.s4 1966171168
        %v636 = vunpack.c.0.s8 %v635
        %v637 = vlaneseq
        %v638 = vshrl.u32 %v637, 7
        %v639 = vsub.s32 %v636, %v638
        %v640 = vrot.slane %v612, %v639
        %v641 = vcombine.high %v619, %v619
        %v642 = vcombine.high %v626, %v626
        %v643 = vcombine.high %v633, %v633
        %v644 = vcombine.high %v640, %v640
        %v645 = vcombine.high %v293, %v293
        %v647 = vunpack.c.l.s4 1966171168
        %v648 = vunpack.c.0.s8 %v647
        %v649 = vlaneseq
        %v650 = vshrl.u32 %v649, 7
        %v651 = vsub.s32 %v648, %v650
        %v652 = vrot.slane %v293, %v651
        %v654 = vunpack.c.l.s4 1966171168
        %v655 = vunpack.c.0.s8 %v654
        %v656 = vlaneseq
        %v657 = vshrl.u32 %v656, 7
        %v658 = vsub.s32 %v655, %v657
        %v659 = vrot.slane %v645, %v658
        %v660 = vcombine.high %v652, %v652
        %v661 = vcombine.high %v659, %v659
        %v663 = vunpack.c.l.s4 1966171168
        %v664 = vunpack.c.0.s8 %v663
        %v665 = vlaneseq
        %v666 = vshrl.u32 %v665, 7
        %v667 = vsub.s32 %v664, %v666
        %v668 = vrot.slane %v652, %v667
        %v670 = vunpack.c.l.s4 1966171168
        %v671 = vunpack.c.0.s8 %v670
        %v672 = vlaneseq
        %v673 = vshrl.u32 %v672, 7
        %v674 = vsub.s32 %v671, %v673
        %v675 = vrot.slane %v659, %v674
        %v677 = vunpack.c.l.s4 1966171168
        %v678 = vunpack.c.0.s8 %v677
        %v679 = vlaneseq
        %v680 = vshrl.u32 %v679, 7
        %v681 = vsub.s32 %v678, %v680
        %v682 = vrot.slane %v660, %v681
        %v684 = vunpack.c.l.s4 1966171168
        %v685 = vunpack.c.0.s8 %v684
        %v686 = vlaneseq
        %v687 = vshrl.u32 %v686, 7
        %v688 = vsub.s32 %v685, %v687
        %v689 = vrot.slane %v661, %v688
        %v690 = vcombine.high %v668, %v668
        %v691 = vcombine.high %v675, %v675
        %v692 = vcombine.high %v682, %v682
        %v693 = vcombine.high %v689, %v689
        %v694 = vlaneseq
        %v695 = vshrl.u32 %v694, 7
        %v696 = vsub.s32 0, %v695
        %v697 = vrot.slane %v325, %v696
        %v698 = vlaneseq
        %v699 = vshrl.u32 %v698, 7
        %v700 = vsub.s32 0, %v699
        %v701 = vrot.slane %v339, %v700
        %v702 = vlaneseq
        %v703 = vshrl.u32 %v702, 7
        %v704 = vsub.s32 0, %v703
        %v705 = vrot.slane %v347, %v704
        %v706 = vlaneseq
        %v707 = vshrl.u32 %v706, 7
        %v708 = vsub.s32 0, %v707
        %v709 = vrot.slane %v349, %v708
        %v710 = vlaneseq
        %v711 = vshrl.u32 %v710, 7
        %v712 = vsub.s32 0, %v711
        %v713 = vrot.slane %v332, %v712
        %v714 = vlaneseq
        %v715 = vshrl.u32 %v714, 7
        %v716 = vsub.s32 0, %v715
        %v717 = vrot.slane %v346, %v716
        %v718 = vlaneseq
        %v719 = vshrl.u32 %v718, 7
        %v720 = vsub.s32 0, %v719
        %v721 = vrot.slane %v348, %v720
        %v722 = vlaneseq
        %v723 = vshrl.u32 %v722, 7
        %v724 = vsub.s32 0, %v723
        %v725 = vrot.slane %v350, %v724
        %v726 = vlaneseq
        %v727 = vshrl.u32 %v726, 7
        %v728 = vsub.s32 0, %v727
        %v729 = vrot.slane %v374, %v728
        %v730 = vlaneseq
        %v731 = vshrl.u32 %v730, 7
        %v732 = vsub.s32 0, %v731
        %v733 = vrot.slane %v388, %v732
        %v734 = vlaneseq
        %v735 = vshrl.u32 %v734, 7
        %v736 = vsub.s32 0, %v735
        %v737 = vrot.slane %v396, %v736
        %v738 = vlaneseq
        %v739 = vshrl.u32 %v738, 7
        %v740 = vsub.s32 0, %v739
        %v741 = vrot.slane %v398, %v740
        %v742 = vlaneseq
        %v743 = vshrl.u32 %v742, 7
        %v744 = vsub.s32 0, %v743
        %v745 = vrot.slane %v381, %v744
        %v746 = vlaneseq
        %v747 = vshrl.u32 %v746, 7
        %v748 = vsub.s32 0, %v747
        %v749 = vrot.slane %v395, %v748
        %v750 = vlaneseq
        %v751 = vshrl.u32 %v750, 7
        %v752 = vsub.s32 0, %v751
        %v753 = vrot.slane %v397, %v752
        %v754 = vlaneseq
        %v755 = vshrl.u32 %v754, 7
        %v756 = vsub.s32 0, %v755
        %v757 = vrot.slane %v399, %v756
        %v758 = vlaneseq
        %v759 = vshrl.u32 %v758, 7
        %v760 = vsub.s32 0, %v759
        %v761 = vrot.slane %v423, %v760
        %v762 = vlaneseq
        %v763 = vshrl.u32 %v762, 7
        %v764 = vsub.s32 0, %v763
        %v765 = vrot.slane %v437, %v764
        %v766 = vlaneseq
        %v767 = vshrl.u32 %v766, 7
        %v768 = vsub.s32 0, %v767
        %v769 = vrot.slane %v445, %v768
        %v770 = vlaneseq
        %v771 = vshrl.u32 %v770, 7
        %v772 = vsub.s32 0, %v771
        %v773 = vrot.slane %v447, %v772
        %v774 = vlaneseq
        %v775 = vshrl.u32 %v774, 7
        %v776 = vsub.s32 0, %v775
        %v777 = vrot.slane %v430, %v776
        %v778 = vlaneseq
        %v779 = vshrl.u32 %v778, 7
        %v780 = vsub.s32 0, %v779
        %v781 = vrot.slane %v444, %v780
        %v782 = vlaneseq
        %v783 = vshrl.u32 %v782, 7
        %v784 = vsub.s32 0, %v783
        %v785 = vrot.slane %v446, %v784
        %v786 = vlaneseq
        %v787 = vshrl.u32 %v786, 7
        %v788 = vsub.s32 0, %v787
        %v789 = vrot.slane %v448, %v788
        %v790 = vlaneseq
        %v791 = vshrl.u32 %v790, 7
        %v792 = vsub.s32 0, %v791
        %v793 = vrot.slane %v472, %v792
        %v794 = vlaneseq
        %v795 = vshrl.u32 %v794, 7
        %v796 = vsub.s32 0, %v795
        %v797 = vrot.slane %v486, %v796
        %v798 = vlaneseq
        %v799 = vshrl.u32 %v798, 7
        %v800 = vsub.s32 0, %v799
        %v801 = vrot.slane %v494, %v800
        %v802 = vlaneseq
        %v803 = vshrl.u32 %v802, 7
        %v804 = vsub.s32 0, %v803
        %v805 = vrot.slane %v496, %v804
        %v806 = vlaneseq
        %v807 = vshrl.u32 %v806, 7
        %v808 = vsub.s32 0, %v807
        %v809 = vrot.slane %v479, %v808
        %v810 = vlaneseq
        %v811 = vshrl.u32 %v810, 7
        %v812 = vsub.s32 0, %v811
        %v813 = vrot.slane %v493, %v812
        %v814 = vlaneseq
        %v815 = vshrl.u32 %v814, 7
        %v816 = vsub.s32 0, %v815
        %v817 = vrot.slane %v495, %v816
        %v818 = vlaneseq
        %v819 = vshrl.u32 %v818, 7
        %v820 = vsub.s32 0, %v819
        %v821 = vrot.slane %v497, %v820
        %v822 = vlaneseq
        %v823 = vshrl.u32 %v822, 7
        %v824 = vsub.s32 0, %v823
        %v825 = vrot.slane %v521, %v824
        %v826 = vlaneseq
        %v827 = vshrl.u32 %v826, 7
        %v828 = vsub.s32 0, %v827
        %v829 = vrot.slane %v535, %v828
        %v830 = vlaneseq
        %v831 = vshrl.u32 %v830, 7
        %v832 = vsub.s32 0, %v831
        %v833 = vrot.slane %v543, %v832
        %v834 = vlaneseq
        %v835 = vshrl.u32 %v834, 7
        %v836 = vsub.s32 0, %v835
        %v837 = vrot.slane %v545, %v836
        %v838 = vlaneseq
        %v839 = vshrl.u32 %v838, 7
        %v840 = vsub.s32 0, %v839
        %v841 = vrot.slane %v528, %v840
        %v842 = vlaneseq
        %v843 = vshrl.u32 %v842, 7
        %v844 = vsub.s32 0, %v843
        %v845 = vrot.slane %v542, %v844
        %v846 = vlaneseq
        %v847 = vshrl.u32 %v846, 7
        %v848 = vsub.s32 0, %v847
        %v849 = vrot.slane %v544, %v848
        %v850 = vlaneseq
        %v851 = vshrl.u32 %v850, 7
        %v852 = vsub.s32 0, %v851
        %v853 = vrot.slane %v546, %v852
        %v854 = vlaneseq
        %v855 = vshrl.u32 %v854, 7
        %v856 = vsub.s32 0, %v855
        %v857 = vrot.slane %v570, %v856
        %v858 = vlaneseq
        %v859 = vshrl.u32 %v858, 7
        %v860 = vsub.s32 0, %v859
        %v861 = vrot.slane %v584, %v860
        %v862 = vlaneseq
        %v863 = vshrl.u32 %v862, 7
        %v864 = vsub.s32 0, %v863
        %v865 = vrot.slane %v592, %v864
        %v866 = vlaneseq
        %v867 = vshrl.u32 %v866, 7
        %v868 = vsub.s32 0, %v867
        %v869 = vrot.slane %v594, %v868
        %v870 = vlaneseq
        %v871 = vshrl.u32 %v870, 7
        %v872 = vsub.s32 0, %v871
        %v873 = vrot.slane %v577, %v872
        %v874 = vlaneseq
        %v875 = vshrl.u32 %v874, 7
        %v876 = vsub.s32 0, %v875
        %v877 = vrot.slane %v591, %v876
        %v878 = vlaneseq
        %v879 = vshrl.u32 %v878, 7
        %v880 = vsub.s32 0, %v879
        %v881 = vrot.slane %v593, %v880
        %v882 = vlaneseq
        %v883 = vshrl.u32 %v882, 7
        %v884 = vsub.s32 0, %v883
        %v885 = vrot.slane %v595, %v884
        %v886 = vlaneseq
        %v887 = vshrl.u32 %v886, 7
        %v888 = vsub.s32 0, %v887
        %v889 = vrot.slane %v619, %v888
        %v890 = vlaneseq
        %v891 = vshrl.u32 %v890, 7
        %v892 = vsub.s32 0, %v891
        %v893 = vrot.slane %v633, %v892
        %v894 = vlaneseq
        %v895 = vshrl.u32 %v894, 7
        %v896 = vsub.s32 0, %v895
        %v897 = vrot.slane %v641, %v896
        %v898 = vlaneseq
        %v899 = vshrl.u32 %v898, 7
        %v900 = vsub.s32 0, %v899
        %v901 = vrot.slane %v643, %v900
        %v902 = vlaneseq
        %v903 = vshrl.u32 %v902, 7
        %v904 = vsub.s32 0, %v903
        %v905 = vrot.slane %v626, %v904
        %v906 = vlaneseq
        %v907 = vshrl.u32 %v906, 7
        %v908 = vsub.s32 0, %v907
        %v909 = vrot.slane %v640, %v908
        %v910 = vlaneseq
        %v911 = vshrl.u32 %v910, 7
        %v912 = vsub.s32 0, %v911
        %v913 = vrot.slane %v642, %v912
        %v914 = vlaneseq
        %v915 = vshrl.u32 %v914, 7
        %v916 = vsub.s32 0, %v915
        %v917 = vrot.slane %v644, %v916
        %v918 = vlaneseq
        %v919 = vshrl.u32 %v918, 7
        %v920 = vsub.s32 0, %v919
        %v921 = vrot.slane %v668, %v920
        %v922 = vlaneseq
        %v923 = vshrl.u32 %v922, 7
        %v924 = vsub.s32 0, %v923
        %v925 = vrot.slane %v682, %v924
        %v926 = vlaneseq
        %v927 = vshrl.u32 %v926, 7
        %v928 = vsub.s32 0, %v927
        %v929 = vrot.slane %v690, %v928
        %v930 = vlaneseq
        %v931 = vshrl.u32 %v930, 7
        %v932 = vsub.s32 0, %v931
        %v933 = vrot.slane %v692, %v932
        %v934 = vlaneseq
        %v935 = vshrl.u32 %v934, 7
        %v936 = vsub.s32 0, %v935
        %v937 = vrot.slane %v675, %v936
        %v938 = vlaneseq
        %v939 = vshrl.u32 %v938, 7
        %v940 = vsub.s32 0, %v939
        %v941 = vrot.slane %v689, %v940
        %v942 = vlaneseq
        %v943 = vshrl.u32 %v942, 7
        %v944 = vsub.s32 0, %v943
        %v945 = vrot.slane %v691, %v944
        %v946 = vlaneseq
        %v947 = vshrl.u32 %v946, 7
        %v948 = vsub.s32 0, %v947
        %v949 = vrot.slane %v693, %v948
        %v1014 = vadd.f32 %v222, %v697
        %v1015 = vadd.f32 %v223, %v701
        %v1016 = vadd.f32 %v224, %v705
        %v1017 = vadd.f32 %v225, %v709
        %v1018 = vadd.f32 %v226, %v713
        %v1019 = vadd.f32 %v227, %v717
        %v1020 = vadd.f32 %v228, %v721
        %v1021 = vadd.f32 %v229, %v725
        %v1022 = vadd.f32 %v230, %v729
        %v1023 = vadd.f32 %v231, %v733
        %v1024 = vadd.f32 %v232, %v737
        %v1025 = vadd.f32 %v233, %v741
        %v1026 = vadd.f32 %v234, %v745
        %v1027 = vadd.f32 %v235, %v749
        %v1028 = vadd.f32 %v236, %v753
        %v1029 = vadd.f32 %v237, %v757
        %v1030 = vadd.f32 %v238, %v761
        %v1031 = vadd.f32 %v239, %v765
        %v1032 = vadd.f32 %v240, %v769
        %v1033 = vadd.f32 %v241, %v773
        %v1034 = vadd.f32 %v242, %v777
        %v1035 = vadd.f32 %v243, %v781
        %v1036 = vadd.f32 %v244, %v785
        %v1037 = vadd.f32 %v245, %v789
        %v1038 = vadd.f32 %v246, %v793
        %v1039 = vadd.f32 %v247, %v797
        %v1040 = vadd.f32 %v248, %v801
        %v1041 = vadd.f32 %v249, %v805
        %v1042 = vadd.f32 %v250, %v809
        %v1043 = vadd.f32 %v251, %v813
        %v1044 = vadd.f32 %v252, %v817
        %v1045 = vadd.f32 %v253, %v821
        %v1046 = vadd.f32 %v254, %v825
        %v1047 = vadd.f32 %v255, %v829
        %v1048 = vadd.f32 %v256, %v833
        %v1049 = vadd.f32 %v257, %v837
        %v1050 = vadd.f32 %v258, %v841
        %v1051 = vadd.f32 %v259, %v845
        %v1052 = vadd.f32 %v260, %v849
        %v1053 = vadd.f32 %v261, %v853
        %v1054 = vadd.f32 %v262, %v857
        %v1055 = vadd.f32 %v263, %v861
        %v1056 = vadd.f32 %v264, %v865
        %v1057 = vadd.f32 %v265, %v869
        %v1058 = vadd.f32 %v266, %v873
        %v1059 = vadd.f32 %v267, %v877
        %v1060 = vadd.f32 %v268, %v881
        %v1061 = vadd.f32 %v269, %v885
        %v1062 = vadd.f32 %v270, %v889
        %v1063 = vadd.f32 %v271, %v893
        %v1064 = vadd.f32 %v272, %v897
        %v1065 = vadd.f32 %v273, %v901
        %v1066 = vadd.f32 %v274, %v905
        %v1067 = vadd.f32 %v275, %v909
        %v1068 = vadd.f32 %v276, %v913
        %v1069 = vadd.f32 %v277, %v917
        %v1070 = vadd.f32 %v278, %v921
        %v1071 = vadd.f32 %v279, %v925
        %v1072 = vadd.f32 %v280, %v929
        %v1073 = vadd.f32 %v281, %v933
        %v1074 = vadd.f32 %v282, %v937
        %v1075 = vadd.f32 %v283, %v941
        %v1076 = vadd.f32 %v284, %v945
        %v1077 = vadd.f32 %v285, %v949
        %1078 = vst [vmem:[%s218] sm:$0xff] %v1014
        %1079 = vst [vmem:[%s218 + $0x8] sm:$0xff] %v1015
        %1080 = vst [vmem:[%s218 + $0x10] sm:$0xff] %v1016
        %1081 = vst [vmem:[%s218 + $0x18] sm:$0xff] %v1017
        %1082 = vst [vmem:[%s218 + $0x20] sm:$0xff] %v1018
        %1083 = vst [vmem:[%s218 + $0x28] sm:$0xff] %v1019
        %1084 = vst [vmem:[%s218 + $0x30] sm:$0xff] %v1020
        %1085 = vst [vmem:[%s218 + $0x38] sm:$0xff] %v1021
        %1086 = vst [vmem:[%s218 + $0x40] sm:$0xff] %v1022
        %1087 = vst [vmem:[%s218 + $0x48] sm:$0xff] %v1023
        %1088 = vst [vmem:[%s218 + $0x50] sm:$0xff] %v1024
        %1089 = vst [vmem:[%s218 + $0x58] sm:$0xff] %v1025
        %1090 = vst [vmem:[%s218 + $0x60] sm:$0xff] %v1026
        %1091 = vst [vmem:[%s218 + $0x68] sm:$0xff] %v1027
        %1092 = vst [vmem:[%s218 + $0x70] sm:$0xff] %v1028
        %1093 = vst [vmem:[%s218 + $0x78] sm:$0xff] %v1029
        %1094 = vst [vmem:[%s218 + $0x80] sm:$0xff] %v1030
        %1095 = vst [vmem:[%s218 + $0x88] sm:$0xff] %v1031
        %1096 = vst [vmem:[%s218 + $0x90] sm:$0xff] %v1032
        %1097 = vst [vmem:[%s218 + $0x98] sm:$0xff] %v1033
        %1098 = vst [vmem:[%s218 + $0xa0] sm:$0xff] %v1034
        %1099 = vst [vmem:[%s218 + $0xa8] sm:$0xff] %v1035
        %1100 = vst [vmem:[%s218 + $0xb0] sm:$0xff] %v1036
        %1101 = vst [vmem:[%s218 + $0xb8] sm:$0xff] %v1037
        %1102 = vst [vmem:[%s218 + $0xc0] sm:$0xff] %v1038
        %1103 = vst [vmem:[%s218 + $0xc8] sm:$0xff] %v1039
        %1104 = vst [vmem:[%s218 + $0xd0] sm:$0xff] %v1040
        %1105 = vst [vmem:[%s218 + $0xd8] sm:$0xff] %v1041
        %1106 = vst [vmem:[%s218 + $0xe0] sm:$0xff] %v1042
        %1107 = vst [vmem:[%s218 + $0xe8] sm:$0xff] %v1043
        %1108 = vst [vmem:[%s218 + $0xf0] sm:$0xff] %v1044
        %1109 = vst [vmem:[%s218 + $0xf8] sm:$0xff] %v1045
        %1110 = vst [vmem:[%s218 + $0x100] sm:$0xff] %v1046
        %1111 = vst [vmem:[%s218 + $0x108] sm:$0xff] %v1047
        %1112 = vst [vmem:[%s218 + $0x110] sm:$0xff] %v1048
        %1113 = vst [vmem:[%s218 + $0x118] sm:$0xff] %v1049
        %1114 = vst [vmem:[%s218 + $0x120] sm:$0xff] %v1050
        %1115 = vst [vmem:[%s218 + $0x128] sm:$0xff] %v1051
        %1116 = vst [vmem:[%s218 + $0x130] sm:$0xff] %v1052
        %1117 = vst [vmem:[%s218 + $0x138] sm:$0xff] %v1053
        %1118 = vst [vmem:[%s218 + $0x140] sm:$0xff] %v1054
        %1119 = vst [vmem:[%s218 + $0x148] sm:$0xff] %v1055
        %1120 = vst [vmem:[%s218 + $0x150] sm:$0xff] %v1056
        %1121 = vst [vmem:[%s218 + $0x158] sm:$0xff] %v1057
        %1122 = vst [vmem:[%s218 + $0x160] sm:$0xff] %v1058
        %1123 = vst [vmem:[%s218 + $0x168] sm:$0xff] %v1059
        %1124 = vst [vmem:[%s218 + $0x170] sm:$0xff] %v1060
        %1125 = vst [vmem:[%s218 + $0x178] sm:$0xff] %v1061
        %1126 = vst [vmem:[%s218 + $0x180] sm:$0xff] %v1062
        %1127 = vst [vmem:[%s218 + $0x188] sm:$0xff] %v1063
        %1128 = vst [vmem:[%s218 + $0x190] sm:$0xff] %v1064
        %1129 = vst [vmem:[%s218 + $0x198] sm:$0xff] %v1065
        %1130 = vst [vmem:[%s218 + $0x1a0] sm:$0xff] %v1066
        %1131 = vst [vmem:[%s218 + $0x1a8] sm:$0xff] %v1067
        %1132 = vst [vmem:[%s218 + $0x1b0] sm:$0xff] %v1068
        %1133 = vst [vmem:[%s218 + $0x1b8] sm:$0xff] %v1069
        %1134 = vst [vmem:[%s218 + $0x1c0] sm:$0xff] %v1070
        %1135 = vst [vmem:[%s218 + $0x1c8] sm:$0xff] %v1071
        %1136 = vst [vmem:[%s218 + $0x1d0] sm:$0xff] %v1072
        %1137 = vst [vmem:[%s218 + $0x1d8] sm:$0xff] %v1073
        %1138 = vst [vmem:[%s218 + $0x1e0] sm:$0xff] %v1074
        %1139 = vst [vmem:[%s218 + $0x1e8] sm:$0xff] %v1075
        %1140 = vst [vmem:[%s218 + $0x1f0] sm:$0xff] %v1076
        %1141 = vst [vmem:[%s218 + $0x1f8] sm:$0xff] %v1077
        %s1142 = sand.u32 %s98, 1
        %s1143 = scalar_lea.sflag [#allocation4], %s1142
        %s1144 = sand.u32 %s98, 1
        %s1145 = smul.addr %s1144, 512
        %s1146 = scalar_lea.vmem [#allocation7], %s1145
        // Predicated region
        $region37: #{tpu_custom_call.1} parent=27 // pred_check
          %p1147 = pneg %p108
        $region38: #{tpu_custom_call.1} parent=27 // pred_check_branch
          %1149 = sbr.rel (%p1147) target = $region40
        $region39: #{tpu_custom_call.1} parent=27 // pred_region
          %s1150 = smul.u32 64, %s26
          %s1152 = ssub.s32 8192, 8192
          %1153 = vsyncadd %s1143, %s1152
          %s1154 = sadd.s32 %s27, %s1150
          %s1155 = smul.addr %s1154, 128
          %s1156 = scalar_lea.hbm %s2, %s1155
          %s1157 = sshll.u32 %s1146, 4
          %s1158 = int_to_ptr.vmem [resolvable:$true] %s1157
          %1163 = dma.vmem_to_hbm [thread:$0]  %s1158, 8192, %s1156, %s1143, 128, 128, 8
        $region40: #{tpu_custom_call.1} parent=27 // pred_fallthru
          _
      $region28: #{tpu_custom_call.1} parent=5 // pred_fallthru
        _
      %p1164 = scmp.le.s32.totalorder 2, %s17
      // Predicated region
      $region41: #{tpu_custom_call.1} parent=5 // pred_check
        %p1165 = pneg %p1164
      $region42: #{tpu_custom_call.1} parent=5 // pred_check_branch
        %1167 = sbr.rel (%p1165) target = $region44
      $region43: #{tpu_custom_call.1} parent=5 // pred_region
        %s1168 = ssub.s32 %s17, 2
        // Predicated region
        $region45: #{tpu_custom_call.1} parent=43 // pred_check
          %p1169 = pneg %p114
        $region46: #{tpu_custom_call.1} parent=43 // pred_check_branch
          %1171 = sbr.rel (%p1169) target = $region48
        $region47: #{tpu_custom_call.1} parent=43 // pred_region
          %s1172 = sand.u32 %s99, 1
          %s1173 = scalar_lea.sflag [#allocation4], %s1172
          %s1174 = sand.u32 %s99, 1
          %s1175 = smul.addr %s1174, 512
          %s1176 = scalar_lea.vmem [#allocation7], %s1175
          %1177 = dma.done %s1173, 8192
        $region48: #{tpu_custom_call.1} parent=43 // pred_fallthru
          _
      $region44: #{tpu_custom_call.1} parent=5 // pred_fallthru
        _
    $region6: #{tpu_custom_call.1} parent=1 // loop_footer
      %s21 = sadd.s32 1, %s17
    $region7: #{tpu_custom_call.1} parent=1 // loop_footer_branch
      %16 = sbr.rel target = $region3
    $region8: #{tpu_custom_call.1} parent=1 // loop_exit
      _
    %1178 = vsyncpa [#allocation3], 1
    %s1179 = scalar_lea.sflag [#allocation3], 1
    %1180 = vsyncpa %s1179, 1
    %1181 = vsyncpa [#allocation6], 1
    %s1182 = scalar_lea.sflag [#allocation6], 1
    %1183 = vsyncpa %s1182, 1
    %1184 = vsyncpa [#allocation4], 1
    %s1185 = scalar_lea.sflag [#allocation4], 1
    %1186 = vsyncpa %s1185, 1

</llo_original>
